<compile_context>
chip_gen: v7x
topology: tpu7x:2x2x1
jax: 0.10.0
libtpu: 0.0.40
codegen_flags: <defaults>
</compile_context>

<pallas_src>
import functools

import jax
import jax.numpy as jnp
from jax.experimental import pallas as pl
from jax.experimental.pallas import tpu as pltpu

_LANES = 128
_SUBLANES = 8
_DEFAULT_BLOCK_ROWS = 1024     # f32 baseline; scaled by 4/itemsize for narrow dtypes
_SMALL_INPUT_BYTES = 1 << 20   # below this a fused XLA reduction beats the kernel


def _round_up(x, m):
    return ((x + m - 1) // m) * m


def _reference(y_hat, y, lambdas):
    d = y_hat.astype(jnp.float32) - y.astype(jnp.float32)
    mse = jnp.mean(d * d)
    mae = jnp.mean(jnp.abs(d))
    return lambdas[0] * mse + lambdas[1] * mae


def _partial_sums_kernel(yhat_ref, y_ref, osq_ref, oabs_ref, *,
                         rows, block_rows, n_inner, needs_mask):
    """Per-core partial sums of squared / absolute differences.

    yhat_ref : VMEM (block_rows, 128)  tile of predictions (native dtype)
    y_ref    : VMEM (block_rows, 128)  tile of labels      (native dtype)
    osq_ref  : VMEM (8, 128) f32       per-core resident accumulator (sum d^2)
    oabs_ref : VMEM (8, 128) f32       per-core resident accumulator (sum |d|)
    """
    c = pl.program_id(0)   # TensorCore shard ("parallel")
    i = pl.program_id(1)   # streaming step within the shard ("arbitrary")

    @pl.when(i == 0)
    def _init():
        osq_ref[...] = jnp.zeros_like(osq_ref)
        oabs_ref[...] = jnp.zeros_like(oabs_ref)

    d = yhat_ref[...].astype(jnp.float32) - y_ref[...].astype(jnp.float32)

    if needs_mask:
        # Row-only mask (lane padding never reaches the kernel). Kills:
        #  * stale VMEM rows of the final partial block (Pallas only DMAs the
        #    valid portion), and
        #  * whole virtual blocks past `rows` (the clamped duplicate block a
        #    core picks up when blocks don't split evenly across cores).
        row_ids = jax.lax.broadcasted_iota(jnp.int32, (block_rows, _LANES), 0)
        global_row = (c * n_inner + i) * block_rows + row_ids
        d = jnp.where(global_row < rows, d, 0.0)

    # Register/VMEM-local partial reduction down to one (8,128) tile per step:
    # pure vreg-aligned VALU adds (no XLU), and only one accumulator
    # load+store per grid step instead of per data vreg.
    d3 = d.reshape(block_rows // _SUBLANES, _SUBLANES, _LANES)
    osq_ref[...] += jnp.sum(d3 * d3, axis=0)
    oabs_ref[...] += jnp.sum(jnp.abs(d3), axis=0)


def _pallas_partial_sums(yhat2d, y2d, block_rows):
    """Returns (sum of squared diff, sum of abs diff) over a (rows, 128) slab."""
    rows = yhat2d.shape[0]
    itemsize = min(yhat2d.dtype.itemsize, y2d.dtype.itemsize)

    # Sublane packing of the narrowest streamed dtype: 8 f32 / 16 bf16 / 32 int8-fp8.
    sub = max(_SUBLANES, 32 // itemsize)
    # Scale rows/step so bytes/step stays ~constant as the dtype narrows
    # (amortizes the ~0.35us per-grid-step overhead at >=85% of HBM roofline).
    br = (block_rows * 4) // itemsize
    br = min(br, _round_up(rows, sub))
    br = max(sub, _round_up(br, sub))

    total_blocks = pl.cdiv(rows, br)
    ncores = 2 if total_blocks > 1 else 1     # shard stream across v7x's two TCs
    n_inner = pl.cdiv(total_blocks, ncores)
    last_block = total_blocks - 1
    needs_mask = (ncores * n_inner * br) != rows

    def in_map(c, i):
        # Clamp so a core whose share overhangs the array re-reads the last
        # real block; those virtual rows are masked to zero in-kernel.
        return (jnp.minimum(c * n_inner + i, last_block), 0)

    def out_map(c, i):
        return (c, 0)

    kernel = functools.partial(
        _partial_sums_kernel,
        rows=rows, block_rows=br, n_inner=n_inner, needs_mask=needs_mask)

    in_bytes = rows * _LANES * (yhat2d.dtype.itemsize + y2d.dtype.itemsize)
    out_bytes = 2 * ncores * _SUBLANES * _LANES * 4
    cost = pl.CostEstimate(
        flops=5 * rows * _LANES,      # diff, sq, abs, 2 accumulate adds (mem-bound)
        transcendentals=0,
        bytes_accessed=in_bytes + out_bytes,
    )

    out_sq, out_abs = pl.pallas_call(
        kernel,
        out_shape=(
            jax.ShapeDtypeStruct((ncores * _SUBLANES, _LANES), jnp.float32),
            jax.ShapeDtypeStruct((ncores * _SUBLANES, _LANES), jnp.float32),
        ),
        grid_spec=pltpu.PrefetchScalarGridSpec(
            num_scalar_prefetch=0,
            grid=(ncores, n_inner),
            in_specs=[
                pl.BlockSpec((br, _LANES), in_map),   # y_hat tiles
                pl.BlockSpec((br, _LANES), in_map),   # y tiles
            ],
            out_specs=[
                pl.BlockSpec((_SUBLANES, _LANES), out_map),   # per-core sum d^2
                pl.BlockSpec((_SUBLANES, _LANES), out_map),   # per-core sum |d|
            ],
        ),
        compiler_params=pltpu.CompilerParams(
            dimension_semantics=("parallel", "arbitrary"),
        ),
        cost_estimate=cost,
    )(yhat2d, y2d)

    return jnp.sum(out_sq), jnp.sum(out_abs)


def combined_supervised_losses(y_hat, y, lambdas=None, *,
                               block_rows=_DEFAULT_BLOCK_ROWS,
                               small_input_bytes=_SMALL_INPUT_BYTES):
    """Weighted sum of MSE and L1 losses, fused in one Pallas kernel.

    y_hat, y : arrays of identical shape (e.g. NCHW), any float dtype.
    lambdas  : length-2 weights [w_mse, w_l1] (None -> ones, like the module).
    Returns a scalar float32.
    """
    assert y_hat.shape == y.shape, (y_hat.shape, y.shape)
    if lambdas is None:
        lambdas = jnp.ones((2,), jnp.float32)
    lambdas = jnp.asarray(lambdas, jnp.float32)

    n_elems = y_hat.size
    if n_elems == 0:
        return jnp.float32(0.0)

    total_bytes = n_elems * (y_hat.dtype.itemsize + y.dtype.itemsize)
    n_bulk = (n_elems // _LANES) * _LANES

    # Tiny inputs: pallas_call launch + per-step overhead dominates; a fused
    # XLA reduction is strictly faster and avoids a per-shape kernel compile.
    if n_bulk == 0 or total_bytes < small_input_bytes:
        return _reference(y_hat, y, lambdas)

    # ravel of a contiguous array is a reshape (bitcast, no HBM copy).
    flat_hat = jnp.ravel(y_hat)
    flat_y = jnp.ravel(y)

    # Only the 128-aligned bulk goes through the kernel; the <=127-element
    # remainder is folded in below with plain jnp (never a full-tensor pad).
    sum_sq, sum_abs = _pallas_partial_sums(
        flat_hat[:n_bulk].reshape(-1, _LANES),
        flat_y[:n_bulk].reshape(-1, _LANES),
        block_rows)

    if n_bulk != n_elems:
        td = flat_hat[n_bulk:].astype(jnp.float32) - flat_y[n_bulk:].astype(jnp.float32)
        sum_sq = sum_sq + jnp.sum(td * td)
        sum_abs = sum_abs + jnp.sum(jnp.abs(td))

    # Weighted combine of the global sums (generalizes to any linear loss mix).
    inv_n = jnp.float32(1.0 / n_elems)
    mse = sum_sq * inv_n
    mae = sum_abs * inv_n
    # TODO(synk): arbitrary user-supplied loss callables from the PyTorch module
    # can't be fused generically; this kernel instantiates the MSE + L1 pair.
    return lambdas[0] * mse + lambdas[1] * mae


if __name__ == "__main__":
    key = jax.random.PRNGKey(0)
    lambdas = jnp.array([0.7, 0.3], dtype=jnp.float32)

    # (shape, dtype, block_rows) — chosen to exercise: single-block single-core,
    # even 2-core split, odd block count (clamped duplicate block + partial
    # final block), and a ragged (n % 128 != 0) bf16 input with a jnp tail.
    cases = [
        ((2, 4, 16, 16), jnp.float32, _DEFAULT_BLOCK_ROWS),
        ((2, 4, 128, 96), jnp.float32, 128),
        ((5, 8, 32, 32), jnp.float32, 128),
        ((6, 5, 7, 11), jnp.bfloat16, 8),
    ]

    for idx, (shape, dtype, br) in enumerate(cases):
        k1, k2 = jax.random.split(jax.random.fold_in(key, idx))
        y_hat = jax.random.normal(k1, shape, dtype=jnp.float32).astype(dtype)
        y = jax.random.normal(k2, shape, dtype=jnp.float32).astype(dtype)

        # Force the Pallas kernel path (bypass the small-input early exit).
        loss = jax.block_until_ready(
            combined_supervised_losses(y_hat, y, lambdas,
                                       block_rows=br, small_input_bytes=0))
        ref = jax.block_until_ready(_reference(y_hat, y, lambdas))
        assert jnp.allclose(loss, ref, rtol=1e-4, atol=1e-5), (shape, dtype, loss, ref)

    print("KERNEL_OK")
</pallas_src>

<mosaic_0001>
module attributes {stable_mosaic.version = 11 : i64} {
  func.func @_partial_sums_kernel(%arg0: i32, %arg1: i32, %arg2: memref<16x128xf32, #tpu.memory_space<vmem>>, %arg3: memref<16x128xf32, #tpu.memory_space<vmem>>, %arg4: memref<8x128xf32, #tpu.memory_space<vmem>>, %arg5: memref<8x128xf32, #tpu.memory_space<vmem>>) attributes {dimension_semantics = [#tpu.dimension_semantics<parallel>, #tpu.dimension_semantics<arbitrary>], iteration_bounds = array<i64: 1, 1>, scalar_prefetch = 0 : i64, scratch_operands = 0 : i64, tpu.core_type = #tpu.core_type<tc>, window_params = [{transform_indices = @transform_0, window_bounds = array<i64: 16, 128>}, {transform_indices = @transform_1, window_bounds = array<i64: 16, 128>}, {transform_indices = @transform_2, window_bounds = array<i64: 8, 128>}, {transform_indices = @transform_3, window_bounds = array<i64: 8, 128>}]} {
    %c0_i32 = arith.constant 0 : i32
    %0 = arith.cmpi eq, %arg1, %c0_i32 : i32
    %1 = arith.extui %0 : i1 to i32
    %c0_i32_0 = arith.constant 0 : i32
    %2 = arith.cmpi ne, %1, %c0_i32_0 : i32
    scf.if %2 {
      %cst_13 = arith.constant 0.000000e+00 : f32
      %17 = vector.broadcast %cst_13 : f32 to vector<8x128xf32>
      %c0_14 = arith.constant 0 : index
      %c0_15 = arith.constant 0 : index
      %18 = vector.load %arg4[%c0_14, %c0_15] : memref<8x128xf32, #tpu.memory_space<vmem>>, vector<8x128xf32>
      tpu.vector_store %arg4[%c0_14, %c0_15], %17 {strides = array<i32>} : memref<8x128xf32, #tpu.memory_space<vmem>>, vector<8x128xf32>,
      %cst_16 = arith.constant 0.000000e+00 : f32
      %19 = vector.broadcast %cst_16 : f32 to vector<8x128xf32>
      %c0_17 = arith.constant 0 : index
      %c0_18 = arith.constant 0 : index
      %20 = vector.load %arg5[%c0_17, %c0_18] : memref<8x128xf32, #tpu.memory_space<vmem>>, vector<8x128xf32>
      tpu.vector_store %arg5[%c0_17, %c0_18], %19 {strides = array<i32>} : memref<8x128xf32, #tpu.memory_space<vmem>>, vector<8x128xf32>,
    } else {
    }
    %c0 = arith.constant 0 : index
    %c0_1 = arith.constant 0 : index
    %3 = vector.load %arg2[%c0, %c0_1] : memref<16x128xf32, #tpu.memory_space<vmem>>, vector<16x128xf32>
    %c0_2 = arith.constant 0 : index
    %c0_3 = arith.constant 0 : index
    %4 = vector.load %arg3[%c0_2, %c0_3] : memref<16x128xf32, #tpu.memory_space<vmem>>, vector<16x128xf32>
    %5 = arith.subf %3, %4 : vector<16x128xf32>
    %6 = vector.shape_cast %5 : vector<16x128xf32> to vector<2x8x128xf32>
    %c0_4 = arith.constant 0 : index
    %c0_5 = arith.constant 0 : index
    %7 = vector.load %arg4[%c0_4, %c0_5] : memref<8x128xf32, #tpu.memory_space<vmem>>, vector<8x128xf32>
    %8 = arith.mulf %6, %6 : vector<2x8x128xf32>
    %cst = arith.constant dense<0.000000e+00> : vector<8x128xf32>
    %9 = vector.multi_reduction <add>, %8, %cst [0] : vector<2x8x128xf32> to vector<8x128xf32>
    %10 = arith.addf %7, %9 : vector<8x128xf32>
    %c0_6 = arith.constant 0 : index
    %c0_7 = arith.constant 0 : index
    %11 = vector.load %arg4[%c0_6, %c0_7] : memref<8x128xf32, #tpu.memory_space<vmem>>, vector<8x128xf32>
    tpu.vector_store %arg4[%c0_6, %c0_7], %10 {strides = array<i32>} : memref<8x128xf32, #tpu.memory_space<vmem>>, vector<8x128xf32>,
    %c0_8 = arith.constant 0 : index
    %c0_9 = arith.constant 0 : index
    %12 = vector.load %arg5[%c0_8, %c0_9] : memref<8x128xf32, #tpu.memory_space<vmem>>, vector<8x128xf32>
    %13 = math.absf %6 : vector<2x8x128xf32>
    %cst_10 = arith.constant dense<0.000000e+00> : vector<8x128xf32>
    %14 = vector.multi_reduction <add>, %13, %cst_10 [0] : vector<2x8x128xf32> to vector<8x128xf32>
    %15 = arith.addf %12, %14 : vector<8x128xf32>
    %c0_11 = arith.constant 0 : index
    %c0_12 = arith.constant 0 : index
    %16 = vector.load %arg5[%c0_11, %c0_12] : memref<8x128xf32, #tpu.memory_space<vmem>>, vector<8x128xf32>
    tpu.vector_store %arg5[%c0_11, %c0_12], %15 {strides = array<i32>} : memref<8x128xf32, #tpu.memory_space<vmem>>, vector<8x128xf32>,
    return
  }
  func.func @transform_0(%arg0: i32, %arg1: i32) -> (i32, i32) {
    %c1_i32 = arith.constant 1 : i32
    %0 = arith.muli %arg0, %c1_i32 : i32
    %1 = arith.addi %0, %arg1 : i32
    %c0_i32 = arith.constant 0 : i32
    %2 = arith.minsi %1, %c0_i32 : i32
    %c0_i32_0 = arith.constant 0 : i32
    %c0_i32_1 = arith.constant 0 : i32
    return %2, %c0_i32_0 : i32, i32
  }
  func.func @transform_1(%arg0: i32, %arg1: i32) -> (i32, i32) {
    %c1_i32 = arith.constant 1 : i32
    %0 = arith.muli %arg0, %c1_i32 : i32
    %1 = arith.addi %0, %arg1 : i32
    %c0_i32 = arith.constant 0 : i32
    %2 = arith.minsi %1, %c0_i32 : i32
    %c0_i32_0 = arith.constant 0 : i32
    %c0_i32_1 = arith.constant 0 : i32
    return %2, %c0_i32_0 : i32, i32
  }
  func.func @transform_2(%arg0: i32, %arg1: i32) -> (i32, i32) {
    %c0_i32 = arith.constant 0 : i32
    %c0_i32_0 = arith.constant 0 : i32
    return %arg0, %c0_i32 : i32, i32
  }
  func.func @transform_3(%arg0: i32, %arg1: i32) -> (i32, i32) {
    %c0_i32 = arith.constant 0 : i32
    %c0_i32_0 = arith.constant 0 : i32
    return %arg0, %c0_i32 : i32, i32
  }
}

</mosaic_0001>

<llo_original>
// kernel: tpu_custom_call.1
$region0: #{tpu_custom_call.1}
  #allocation0 [shape = 'u32[]', space=smem, size = 0x4, offset = 0x4, fixed_abs, tag = 'smem constant byte address 0x4 - core index']
  #allocation1 [shape = 'u32[144,128]{1,0:T(1,128)}', space=vmem, size = 0x12000, scoped, tag = 'internal scratch']
  %s0 = inlined_call_operand.hbm [shape: f32[16,128], index: 0, kind: input, shape index: {}]
  %s1 = inlined_call_operand.hbm [shape: f32[16,128], index: 1, kind: input, shape index: {}]
  %s2 = inlined_call_operand.hbm [shape: f32[8,128], index: 2, kind: output, shape index: {0}]
  %s3 = inlined_call_operand.hbm [shape: f32[8,128], index: 3, kind: output, shape index: {1}]
  %4 = xla_tuple %s2, %s3
  %s5 = sld [smem:[#allocation0]]
  $region38: #{tpu_custom_call.1} parent=0
    _
  %s7 = ssub.s32 1, %s5
  %s8 = scalar_select 0, %s7, %s5
  $region1: #{tpu_custom_call.1} parent=0
    #allocation2 [shape = 'u8[8192]{0}', space=vmem, size = 0x2000, scoped, tag = 'input window, operand 0, single buffered']
    #allocation3 [shape = 's32[1]{0}', space=sflag, size = 0x4, scoped, tag = 'scoped memory for tpu_custom_call.1']
    #allocation4 [shape = 's32[1]{0}', space=sflag, size = 0x4, scoped, tag = 'scoped memory for tpu_custom_call.1']
    #allocation5 [shape = 'u8[8192]{0}', space=vmem, size = 0x2000, scoped, tag = 'input window, operand 1, single buffered']
    #allocation6 [shape = 's32[1]{0}', space=sflag, size = 0x4, scoped, tag = 'scoped memory for tpu_custom_call.1']
    #allocation7 [shape = 'u8[4096]{0}', space=vmem, size = 0x1000, scoped, tag = 'output window, operand 0, single buffered']
    #allocation8 [shape = 'u8[4096]{0}', space=vmem, size = 0x1000, scoped, tag = 'output window, operand 1, single buffered']
    #allocation9 [shape = 's32[1]{0}', space=sflag, size = 0x4, scoped, tag = 'scoped memory for tpu_custom_call.1']
    %9 = vsyncpa [#allocation3], 0
    %10 = vsyncpa [#allocation6], 0
    %11 = vsyncpa [#allocation4], 0
    %12 = vsyncpa [#allocation9], 0
    // Predicated region
    $region2: #{tpu_custom_call.1} parent=1 // pred_check
      _
    $region3: #{tpu_custom_call.1} parent=1 // pred_check_branch
      %14 = sbr.rel (0) target = $region5
    $region4: #{tpu_custom_call.1} parent=1 // pred_region
      %s15 = sadd.s32 0, 0
      %p16 = scmp.lt.s32.totalorder %s15, 0
      %s17 = scalar_select %p16, %s15, 0
      %s18 = smul.u32 2, %s17
      %s20 = ssub.s32 256, 256
      %21 = vsyncadd [#allocation3], %s20
      %s22 = smul.addr %s18, 128
      %s23 = scalar_lea.hbm %s0, %s22
      %s24 = sshll.u32 [#allocation2], 4
      %s25 = int_to_ptr.vmem [resolvable:$true] %s24
      %30 = dma.hbm_to_vmem [thread:$0]  %s23, 256, %s25, [#allocation3], 128, 128, 8
    $region5: #{tpu_custom_call.1} parent=1 // pred_fallthru
      _
    // Predicated region
    $region6: #{tpu_custom_call.1} parent=1 // pred_check
      _
    $region7: #{tpu_custom_call.1} parent=1 // pred_check_branch
      %32 = sbr.rel (0) target = $region9
    $region8: #{tpu_custom_call.1} parent=1 // pred_region
      %s33 = sadd.s32 0, 0
      %p34 = scmp.lt.s32.totalorder %s33, 0
      %s35 = scalar_select %p34, %s33, 0
      %s36 = smul.u32 2, %s35
      %s38 = ssub.s32 256, 256
      %39 = vsyncadd [#allocation6], %s38
      %s40 = smul.addr %s36, 128
      %s41 = scalar_lea.hbm %s1, %s40
      %s42 = sshll.u32 [#allocation5], 4
      %s43 = int_to_ptr.vmem [resolvable:$true] %s42
      %48 = dma.hbm_to_vmem [thread:$0]  %s41, 256, %s43, [#allocation6], 128, 128, 8
    $region9: #{tpu_custom_call.1} parent=1 // pred_fallthru
      _
    // Predicated region
    $region10: #{tpu_custom_call.1} parent=1 // pred_check
      _
    $region11: #{tpu_custom_call.1} parent=1 // pred_check_branch
      %50 = sbr.rel (0) target = $region13
    $region12: #{tpu_custom_call.1} parent=1 // pred_region
      %51 = dma.done [#allocation3], 256
    $region13: #{tpu_custom_call.1} parent=1 // pred_fallthru
      _
    // Predicated region
    $region14: #{tpu_custom_call.1} parent=1 // pred_check
      _
    $region15: #{tpu_custom_call.1} parent=1 // pred_check_branch
      %53 = sbr.rel (0) target = $region17
    $region16: #{tpu_custom_call.1} parent=1 // pred_region
      %54 = dma.done [#allocation6], 256
    $region17: #{tpu_custom_call.1} parent=1 // pred_fallthru
      _
    %s55 = sadd.s32 0, 0
    %p56 = scmp.lt.s32.totalorder %s55, 0
    %s57 = scalar_select %p56, %s55, 0
    %s58 = smul.u32 2, %s57
    %s59 = sadd.s32 0, 0
    %p60 = scmp.lt.s32.totalorder %s59, 0
    %s61 = scalar_select %p60, %s59, 0
    %s62 = smul.u32 2, %s61
    %p63 = scmp.eq.s32.totalorder 0, 0
    // Predicated region
    $region18: #{tpu_custom_call.1} parent=1 // pred_check
      %p64 = pneg %p63
    $region19: #{tpu_custom_call.1} parent=1 // pred_check_branch
      %66 = sbr.rel (%p64) target = $region21
    $region20: #{tpu_custom_call.1} parent=1 // pred_region
      %67 = vst [vmem:[#allocation7] sm:$0xff] 0.0
      %68 = vst [vmem:[#allocation8] sm:$0xff] 0.0
    $region21: #{tpu_custom_call.1} parent=1 // pred_fallthru
      _
    %v69 = vld [vmem:[#allocation2] sm:$0xff]
    %v70 = vld [vmem:[#allocation2 + $0x8] sm:$0xff]
    %v71 = vld [vmem:[#allocation5] sm:$0xff]
    %v72 = vld [vmem:[#allocation5 + $0x8] sm:$0xff]
    %v73 = vsub.f32 %v69, %v71
    %v74 = vsub.f32 %v70, %v72
    %v75 = vld [vmem:[#allocation7] sm:$0xff]
    %v76 = vmul.f32 %v73, %v73
    %v77 = vmul.f32 %v74, %v74
    %v78 = vadd.f32 %v76, %v77
    %v79 = vadd.f32 %v75, %v78
    %80 = vst [vmem:[#allocation7] sm:$0xff] %v79
    %v81 = vld [vmem:[#allocation8] sm:$0xff]
    %v82 = vand.u32 2147483647, %v73
    %v83 = vand.u32 2147483647, %v74
    %v84 = vadd.f32 %v82, %v83
    %v85 = vadd.f32 %v81, %v84
    %86 = vst [vmem:[#allocation8] sm:$0xff] %v85
    // Predicated region
    $region22: #{tpu_custom_call.1} parent=1 // pred_check
      _
    $region23: #{tpu_custom_call.1} parent=1 // pred_check_branch
      %88 = sbr.rel (0) target = $region25
    $region24: #{tpu_custom_call.1} parent=1 // pred_region
      %s90 = ssub.s32 128, 128
      %91 = vsyncadd [#allocation4], %s90
      %s93 = sshll.u32 [#allocation7], 4
      %s94 = int_to_ptr.vmem [resolvable:$true] %s93
      %96 = dma.vmem_to_hbm [thread:$0]  %s94, 128, %s2, [#allocation4]
    $region25: #{tpu_custom_call.1} parent=1 // pred_fallthru
      _
    // Predicated region
    $region26: #{tpu_custom_call.1} parent=1 // pred_check
      _
    $region27: #{tpu_custom_call.1} parent=1 // pred_check_branch
      %98 = sbr.rel (0) target = $region29
    $region28: #{tpu_custom_call.1} parent=1 // pred_region
      %s100 = ssub.s32 128, 128
      %101 = vsyncadd [#allocation9], %s100
      %s103 = sshll.u32 [#allocation8], 4
      %s104 = int_to_ptr.vmem [resolvable:$true] %s103
      %106 = dma.vmem_to_hbm [thread:$0]  %s104, 128, %s3, [#allocation9]
    $region29: #{tpu_custom_call.1} parent=1 // pred_fallthru
      _
    // Predicated region
    $region30: #{tpu_custom_call.1} parent=1 // pred_check
      _
    $region31: #{tpu_custom_call.1} parent=1 // pred_check_branch
      %108 = sbr.rel (0) target = $region33
    $region32: #{tpu_custom_call.1} parent=1 // pred_region
      %109 = dma.done [#allocation4], 128
    $region33: #{tpu_custom_call.1} parent=1 // pred_fallthru
      _
    // Predicated region
    $region34: #{tpu_custom_call.1} parent=1 // pred_check
      _
    $region35: #{tpu_custom_call.1} parent=1 // pred_check_branch
      %111 = sbr.rel (0) target = $region37
    $region36: #{tpu_custom_call.1} parent=1 // pred_region
      %112 = dma.done [#allocation9], 128
    $region37: #{tpu_custom_call.1} parent=1 // pred_fallthru
      _
    %113 = vsyncpa [#allocation3], 1
    %114 = vsyncpa [#allocation6], 1
    %115 = vsyncpa [#allocation4], 1
    %116 = vsyncpa [#allocation9], 1

</llo_original>
